<compile_context>
chip_gen: v6e
topology: v6e:2x2x1
jax: 0.10.0
libtpu: 0.0.40
codegen_flags: <defaults>
</compile_context>

<pallas_src>
import functools

import jax
import jax.numpy as jnp
from jax.experimental import pallas as pl
from jax.experimental.pallas import tpu as pltpu

# Per-pixel tags tag = row * _ROW_STRIDE + col.  After rolling the tag vector
# together with the data, a tag difference of exactly _ROW_STRIDE identifies a
# vertical-neighbour pair and a difference of exactly 1 a horizontal-neighbour
# pair; wrap-around and row-seam pairs produced by the cyclic rotation land on
# other values and are masked out.  This is independent of the hardware roll
# direction convention.  (Requires W < _ROW_STRIDE and H * _ROW_STRIDE < 2**31.)
_ROW_STRIDE = 1 << 16


def _losses_kernel(tag_ref, x_ref, out_ref, *, H, W, inv_npix, inv_ndh, inv_ndw):
    n = pl.program_id(0)
    x = x_ref[...]          # (C, H*W) float32, lane-dense block for one sample
    tag = tag_ref[...]      # (1, H*W) int32 pixel tags (row * _ROW_STRIDE + col)

    @pl.when(n == 0)
    def _init():
        out_ref[0] = 0.0
        out_ref[1] = 0.0

    # ---- sparse loss partial: sum over pixels of (logsumexp_c - max_c) -------
    m = jnp.max(x, axis=0, keepdims=True)                  # (1, HW)  XLU reduce
    s = jnp.sum(jnp.exp(x - m), axis=0, keepdims=True)     # EUP exp + XLU reduce
    lse_sum = jnp.sum(jnp.log(s))                          # scalar partial sum

    # ---- continuity loss partials: TV-L1 via XLU rotations --------------------
    def abs_diff_sum(shift, tag_delta):
        xr = pltpu.roll(x, shift, axis=1)        # data rotated by `shift` lanes
        tr = pltpu.roll(tag, shift, axis=1)      # tags rotated identically
        valid = jnp.abs(tr - tag) == tag_delta   # exact neighbour pairs only
        return jnp.sum(jnp.where(valid, jnp.abs(xr - x), 0.0))

    if H >= 2:
        dh_sum = abs_diff_sum(W, _ROW_STRIDE)    # vertical neighbours
        if H == 2:   # +W and -W rotations coincide: each pair is produced twice
            dh_sum = dh_sum * 0.5
    else:
        dh_sum = 0.0
    if W >= 2:
        dw_sum = abs_diff_sum(1, 1)              # horizontal neighbours
    else:
        dw_sum = 0.0

    # ---- accumulate normalized partial sums into the resident SMEM output ----
    out_ref[0] = out_ref[0] + lse_sum * inv_npix
    out_ref[1] = out_ref[1] + dh_sum * inv_ndh + dw_sum * inv_ndw


def losses_forward(x):
    """Runs the Losses module.  Returns (x, sparse_loss, continuity_loss).

    The PyTorch module only returns x (the losses are computed then discarded);
    x is passed through in the wrapper so the kernel never writes it to HBM.
    """
    N, C, H, W = x.shape
    HW = H * W
    x2 = x.reshape(N, C, HW).astype(jnp.float32)   # lane-dense: H*W on the lane axis

    pix = jnp.arange(HW, dtype=jnp.int32)
    tag = ((pix // W) * _ROW_STRIDE + pix % W).reshape(1, HW)

    n_pix = N * H * W
    n_dh = N * C * (H - 1) * W
    n_dw = N * C * H * (W - 1)
    kernel = functools.partial(
        _losses_kernel, H=H, W=W,
        inv_npix=1.0 / n_pix,
        inv_ndh=(1.0 / n_dh) if n_dh else 0.0,
        inv_ndw=(1.0 / n_dw) if n_dw else 0.0,
    )

    # Grid over the batch axis; each step streams one (C, H*W) sample block
    # (double-buffered by the pipeline).  For very large per-sample feature maps
    # the pixel axis would additionally be tiled (same tag-mask logic per tile,
    # with a one-row halo at tile seams) to stay under the per-chip VMEM limit.
    losses = pl.pallas_call(
        kernel,
        out_shape=jax.ShapeDtypeStruct((2,), jnp.float32),
        grid=(N,),
        in_specs=[
            pl.BlockSpec((1, HW), lambda n: (0, 0)),           # pixel tags (shared)
            pl.BlockSpec((None, C, HW), lambda n: (n, 0, 0)),  # one sample per step
        ],
        out_specs=pl.BlockSpec(memory_space=pltpu.MemorySpace.SMEM),
        compiler_params=pltpu.CompilerParams(
            # The batch axis is a reduction into the shared scalar accumulators.
            dimension_semantics=("arbitrary",),
        ),
    )(tag, x2)

    return x, losses[0], losses[1]


def _reference(x):
    # Pure-JAX reference for validation.
    m = jnp.max(x, axis=1)
    sparse = jnp.mean(jax.nn.logsumexp(x, axis=1) - m)
    dh = x[:, :, 1:, :] - x[:, :, :-1, :]
    dw = x[:, :, :, 1:] - x[:, :, :, :-1]
    cont = jnp.mean(jnp.abs(dh)) + jnp.mean(jnp.abs(dw))
    return x, sparse, cont


if __name__ == "__main__":
    key = jax.random.PRNGKey(0)
    # N=2, C=4 (segmentation logits), H=W=16
    x = jax.random.normal(key, (2, 4, 16, 16), dtype=jnp.float32)

    y, sparse, cont = losses_forward(x)
    jax.block_until_ready((y, sparse, cont))

    y_ref, sparse_ref, cont_ref = _reference(x)
    assert jnp.array_equal(y, y_ref), "identity passthrough mismatch"
    assert jnp.allclose(sparse, sparse_ref, rtol=1e-5, atol=1e-5), "sparse_loss mismatch"
    assert jnp.allclose(cont, cont_ref, rtol=1e-5, atol=1e-5), "continuity_loss mismatch"

    print("KERNEL_OK")
</pallas_src>

<mosaic_0001>
module attributes {stable_mosaic.version = 11 : i64} {
  func.func @_losses_kernel(%arg0: i32, %arg1: memref<1x256xi32, #tpu.memory_space<vmem>>, %arg2: memref<1x4x256xf32, #tpu.memory_space<vmem>>, %arg3: memref<2xf32, #tpu.memory_space<smem>>) attributes {dimension_semantics = [#tpu.dimension_semantics<arbitrary>], iteration_bounds = array<i64: 2>, scalar_prefetch = 0 : i64, scratch_operands = 0 : i64, tpu.core_type = #tpu.core_type<tc>, window_params = [{pipeline_mode = #tpu.pipeline_mode<synchronous>, transform_indices = @transform_0, window_bounds = array<i64: 1, 256>}, {transform_indices = @transform_1, window_bounds = array<i64: 1, 4, 256>}, {transform_indices = @transform_2, window_bounds = array<i64: 2>}]} {
    %c0 = arith.constant 0 : index
    %c0_0 = arith.constant 0 : index
    %c0_1 = arith.constant 0 : index
    %0 = vector.load %arg2[%c0, %c0_0, %c0_1] : memref<1x4x256xf32, #tpu.memory_space<vmem>>, vector<1x4x256xf32>
    %1 = vector.shape_cast %0 : vector<1x4x256xf32> to vector<4x256xf32>
    %c0_2 = arith.constant 0 : index
    %c0_3 = arith.constant 0 : index
    %2 = vector.load %arg1[%c0_2, %c0_3] : memref<1x256xi32, #tpu.memory_space<vmem>>, vector<1x256xi32>
    %c0_i32 = arith.constant 0 : i32
    %3 = arith.cmpi eq, %arg0, %c0_i32 : i32
    %4 = arith.extui %3 : i1 to i32
    %c0_i32_4 = arith.constant 0 : i32
    %5 = arith.cmpi ne, %4, %c0_i32_4 : i32
    scf.if %5 {
      %cst_20 = arith.constant 0.000000e+00 : f32
      %c0_21 = arith.constant 0 : index
      %60 = memref.load %arg3[%c0_21] : memref<2xf32, #tpu.memory_space<smem>>
      memref.store %cst_20, %arg3[%c0_21] : memref<2xf32, #tpu.memory_space<smem>>
      %cst_22 = arith.constant 0.000000e+00 : f32
      %c1_23 = arith.constant 1 : index
      %61 = memref.load %arg3[%c1_23] : memref<2xf32, #tpu.memory_space<smem>>
      memref.store %cst_22, %arg3[%c1_23] : memref<2xf32, #tpu.memory_space<smem>>
    } else {
    }
    %cst = arith.constant dense<0xFF800000> : vector<256xf32>
    %6 = vector.multi_reduction <maximumf>, %1, %cst [0] : vector<4x256xf32> to vector<256xf32>
    %7 = vector.shape_cast %6 : vector<256xf32> to vector<1x256xf32>
    %8 = vector.broadcast %7 : vector<1x256xf32> to vector<4x256xf32>
    %9 = arith.subf %1, %8 : vector<4x256xf32>
    %10 = math.exp %9 : vector<4x256xf32>
    %cst_5 = arith.constant dense<0.000000e+00> : vector<256xf32>
    %11 = vector.multi_reduction <add>, %10, %cst_5 [0] : vector<4x256xf32> to vector<256xf32>
    %12 = vector.shape_cast %11 : vector<256xf32> to vector<1x256xf32>
    %13 = math.log %12 : vector<1x256xf32>
    %14 = vector.shape_cast %13 : vector<1x256xf32> to vector<1x1x256xf32>
    %cst_6 = arith.constant dense<0.000000e+00> : vector<1xf32>
    %15 = vector.multi_reduction <add>, %14, %cst_6 [1, 2] : vector<1x1x256xf32> to vector<1xf32>
    %16 = vector.shape_cast %15 : vector<1xf32> to vector<1x1x1xf32>
    %17 = vector.extract %16[0, 0, 0] : f32 from vector<1x1x1xf32>
    %c16_i32 = arith.constant 16 : i32
    %18 = tpu.dynamic_rotate %1 by %c16_i32 dim 1 : vector<4x256xf32>, i32 -> vector<4x256xf32>
    %c16_i32_7 = arith.constant 16 : i32
    %19 = tpu.dynamic_rotate %2 by %c16_i32_7 dim 1 : vector<1x256xi32>, i32 -> vector<1x256xi32>
    %20 = arith.subi %19, %2 : vector<1x256xi32>
    %21 = math.absi %20 : vector<1x256xi32>
    %c65536_i32 = arith.constant 65536 : i32
    %22 = vector.broadcast %c65536_i32 : i32 to vector<1x256xi32>
    %23 = arith.cmpi eq, %21, %22 : vector<1x256xi32>
    %24 = arith.subf %18, %1 : vector<4x256xf32>
    %25 = math.absf %24 : vector<4x256xf32>
    %cst_8 = arith.constant 0.000000e+00 : f32
    %26 = vector.shape_cast %23 : vector<1x256xi1> to vector<1x256xi1>
    %27 = vector.broadcast %26 : vector<1x256xi1> to vector<4x256xi1>
    %28 = vector.broadcast %cst_8 : f32 to vector<4x256xf32>
    %29 = arith.select %27, %25, %28 : vector<4x256xi1>, vector<4x256xf32>
    %30 = vector.shape_cast %29 : vector<4x256xf32> to vector<1x4x256xf32>
    %cst_9 = arith.constant dense<0.000000e+00> : vector<1xf32>
    %31 = vector.multi_reduction <add>, %30, %cst_9 [1, 2] : vector<1x4x256xf32> to vector<1xf32>
    %32 = vector.shape_cast %31 : vector<1xf32> to vector<1x1x1xf32>
    %33 = vector.extract %32[0, 0, 0] : f32 from vector<1x1x1xf32>
    %c1_i32 = arith.constant 1 : i32
    %34 = tpu.dynamic_rotate %1 by %c1_i32 dim 1 : vector<4x256xf32>, i32 -> vector<4x256xf32>
    %c1_i32_10 = arith.constant 1 : i32
    %35 = tpu.dynamic_rotate %2 by %c1_i32_10 dim 1 : vector<1x256xi32>, i32 -> vector<1x256xi32>
    %36 = arith.subi %35, %2 : vector<1x256xi32>
    %37 = math.absi %36 : vector<1x256xi32>
    %c1_i32_11 = arith.constant 1 : i32
    %38 = vector.broadcast %c1_i32_11 : i32 to vector<1x256xi32>
    %39 = arith.cmpi eq, %37, %38 : vector<1x256xi32>
    %40 = arith.subf %34, %1 : vector<4x256xf32>
    %41 = math.absf %40 : vector<4x256xf32>
    %cst_12 = arith.constant 0.000000e+00 : f32
    %42 = vector.shape_cast %39 : vector<1x256xi1> to vector<1x256xi1>
    %43 = vector.broadcast %42 : vector<1x256xi1> to vector<4x256xi1>
    %44 = vector.broadcast %cst_12 : f32 to vector<4x256xf32>
    %45 = arith.select %43, %41, %44 : vector<4x256xi1>, vector<4x256xf32>
    %46 = vector.shape_cast %45 : vector<4x256xf32> to vector<1x4x256xf32>
    %cst_13 = arith.constant dense<0.000000e+00> : vector<1xf32>
    %47 = vector.multi_reduction <add>, %46, %cst_13 [1, 2] : vector<1x4x256xf32> to vector<1xf32>
    %48 = vector.shape_cast %47 : vector<1xf32> to vector<1x1x1xf32>
    %49 = vector.extract %48[0, 0, 0] : f32 from vector<1x1x1xf32>
    %c0_14 = arith.constant 0 : index
    %50 = memref.load %arg3[%c0_14] : memref<2xf32, #tpu.memory_space<smem>>
    %cst_15 = arith.constant 0.001953125 : f32
    %51 = arith.mulf %17, %cst_15 : f32
    %52 = arith.addf %50, %51 : f32
    %c0_16 = arith.constant 0 : index
    %53 = memref.load %arg3[%c0_16] : memref<2xf32, #tpu.memory_space<smem>>
    memref.store %52, %arg3[%c0_16] : memref<2xf32, #tpu.memory_space<smem>>
    %c1 = arith.constant 1 : index
    %54 = memref.load %arg3[%c1] : memref<2xf32, #tpu.memory_space<smem>>
    %cst_17 = arith.constant 5.2083336E-4 : f32
    %55 = arith.mulf %33, %cst_17 : f32
    %56 = arith.addf %54, %55 : f32
    %cst_18 = arith.constant 5.2083336E-4 : f32
    %57 = arith.mulf %49, %cst_18 : f32
    %58 = arith.addf %56, %57 : f32
    %c1_19 = arith.constant 1 : index
    %59 = memref.load %arg3[%c1_19] : memref<2xf32, #tpu.memory_space<smem>>
    memref.store %58, %arg3[%c1_19] : memref<2xf32, #tpu.memory_space<smem>>
    return
  }
  func.func @transform_0(%arg0: i32) -> (i32, i32) {
    %c0_i32 = arith.constant 0 : i32
    %c0_i32_0 = arith.constant 0 : i32
    %c0_i32_1 = arith.constant 0 : i32
    return %c0_i32, %c0_i32_0 : i32, i32
  }
  func.func @transform_1(%arg0: i32) -> (i32, i32, i32) {
    %c0_i32 = arith.constant 0 : i32
    %c0_i32_0 = arith.constant 0 : i32
    %c0_i32_1 = arith.constant 0 : i32
    return %arg0, %c0_i32, %c0_i32_0 : i32, i32, i32
  }
  func.func @transform_2(%arg0: i32) -> i32 {
    %c0_i32 = arith.constant 0 : i32
    %c0_i32_0 = arith.constant 0 : i32
    return %c0_i32 : i32
  }
}

</mosaic_0001>

<llo_original>
// kernel: tpu_custom_call.1
$region0: #{tpu_custom_call.1}
  #allocation0 [shape = 'u32[]', space=smem, size = 0x4, offset = 0x4, fixed_abs, tag = 'smem constant byte address 0x4 - core index']
  #allocation1 [shape = 'u32[144,128]{1,0:T(1,128)}', space=vmem, size = 0x12000, scoped, tag = 'internal scratch']
  %s0 = inlined_call_operand.hbm [shape: s32[1,256], index: 0, kind: input, shape index: {}]
  %s1 = inlined_call_operand.hbm [shape: f32[2,4,256], index: 1, kind: input, shape index: {}]
  %s2 = inlined_call_operand.hbm [shape: f32[2], index: 2, kind: output, shape index: {}]
  %s3 = sld [smem:[#allocation0]]
  $region53: #{tpu_custom_call.1} parent=0
    _
  %s5 = ssub.s32 1, %s3
  %s6 = scalar_select 0, %s5, %s3
  $region1: #{tpu_custom_call.1} parent=0
    #allocation2 [shape = 'u8[1024]{0}', space=vmem, size = 0x400, scoped, tag = 'input window, operand 0, single buffered']
    #allocation3 [shape = 's32[2]{0}', space=sflag, size = 0x8, scoped, tag = 'scoped memory for tpu_custom_call.1']
    #allocation4 [shape = 's32[2]{0}', space=sflag, size = 0x8, scoped, tag = 'scoped memory for tpu_custom_call.1']
    #allocation5 [shape = 'u8[8192]{0}', space=vmem, size = 0x2000, scoped, tag = 'input window, operand 1']
    #allocation6 [shape = 's32[2]{0}', space=sflag, size = 0x8, scoped, tag = 'scoped memory for tpu_custom_call.1']
    #allocation7 [shape = 'u8[512]{0}', space=smem, size = 0x200, scoped, tag = 'output window, operand 0, single buffered']
    %7 = vsyncpa [#allocation3], 0
    %8 = vsyncpa [#allocation6], 0
    %s9 = scalar_lea.sflag [#allocation6], 1
    %10 = vsyncpa %s9, 0
    %11 = vsyncpa [#allocation4], 0
    loop: start=0, step=1, limit=4
    $region2: #{tpu_custom_call.1} parent=1 // loop_pre_header
      _
    $region3: #{tpu_custom_call.1} parent=1 // loop_header
      %s13 = sphi 0, %s17
      %p14 = scmp.ge.s32.totalorder %s13, 4
      %s21 = sphi 0, %s21
      %s23 = sphi 0, %s21
      %s24 = sphi 0, %s23
      %s38 = sphi 0, %s24
      %s44 = sphi 0, %s46
      %s47 = sphi 0, %s44
      %s48 = sphi 0, %s47
      %s64 = sphi 0, %s48
      %s68 = sphi 0, %s68
      %s70 = sphi 0, %s68
      %s71 = sphi 0, %s70
      %s85 = sphi 0, %s71
    $region4: #{tpu_custom_call.1} parent=1 // loop_header_branch
      %16 = sbr.rel (%p14) target = $region8
    $region5: #{tpu_custom_call.1} parent=1 // loop_body
      %s18 = ssub.s32 %s13, 1
      %s19 = ssub.s32 %s13, 2
      %s20 = sadd.s32 %s13, 1
      %s22 = sadd.s32 %s21, 1
      %p25 = scmp.eq.s32.totalorder %s13, 1
      %p26 = scmp.ne.s32.totalorder %s21, %s23
      %p27 = scmp.eq.s32.totalorder %s13, 0
      %p28 = por %p26, %p27
      %p29 = scmp.ne.s32.totalorder %s21, %s23
      %p30 = scmp.eq.s32.totalorder %s18, 1
      %p31 = por %p29, %p30
      %p32 = scmp.ne.s32.totalorder %s23, %s24
      %p33 = scmp.eq.s32.totalorder %s18, 0
      %p34 = por %p32, %p33
      %p35 = scmp.ne.s32.totalorder %s23, %s24
      %p36 = scmp.eq.s32.totalorder %s19, 1
      %p37 = por %p35, %p36
      %p39 = scmp.ne.s32.totalorder %s24, %s38
      %p40 = scmp.eq.s32.totalorder %s19, 0
      %p41 = por %p39, %p40
      %s42 = ssub.s32 %s13, %s20
      %p43 = scmp.eq.s32.totalorder %s42, 0
      %s45 = sadd.s32 %s44, 1
      %s46 = scalar_select %p43, %s44, %s45
      %p49 = pneg %p43
      %p50 = scmp.eq.s32.totalorder %s13, 1
      %p51 = por %p49, %p50
      %p52 = scmp.ne.s32.totalorder %s44, %s47
      %p53 = scmp.eq.s32.totalorder %s13, 0
      %p54 = por %p52, %p53
      %p55 = scmp.ne.s32.totalorder %s44, %s47
      %p56 = scmp.eq.s32.totalorder %s18, 1
      %p57 = por %p55, %p56
      %p58 = scmp.ne.s32.totalorder %s47, %s48
      %p59 = scmp.eq.s32.totalorder %s18, 0
      %p60 = por %p58, %p59
      %p61 = scmp.ne.s32.totalorder %s47, %s48
      %p62 = scmp.eq.s32.totalorder %s19, 1
      %p63 = por %p61, %p62
      %p65 = scmp.ne.s32.totalorder %s48, %s64
      %p66 = scmp.eq.s32.totalorder %s19, 0
      %p67 = por %p65, %p66
      %s69 = sadd.s32 %s68, 1
      %p72 = scmp.eq.s32.totalorder %s13, 1
      %p73 = scmp.ne.s32.totalorder %s68, %s70
      %p74 = scmp.eq.s32.totalorder %s13, 0
      %p75 = por %p73, %p74
      %p76 = scmp.ne.s32.totalorder %s68, %s70
      %p77 = scmp.eq.s32.totalorder %s18, 1
      %p78 = por %p76, %p77
      %p79 = scmp.ne.s32.totalorder %s70, %s71
      %p80 = scmp.eq.s32.totalorder %s18, 0
      %p81 = por %p79, %p80
      %p82 = scmp.ne.s32.totalorder %s70, %s71
      %p83 = scmp.eq.s32.totalorder %s19, 1
      %p84 = por %p82, %p83
      %p86 = scmp.ne.s32.totalorder %s71, %s85
      %p87 = scmp.eq.s32.totalorder %s19, 0
      %p88 = por %p86, %p87
      %p89 = scmp.le.s32.totalorder 1, %s13
      %p90 = scmp.lt.s32.totalorder %s13, 3
      %p91 = pnand %p89, %p90
      %p92 = pneg %p91
      // Predicated region
      $region9: #{tpu_custom_call.1} parent=5 // pred_check
        _
      $region10: #{tpu_custom_call.1} parent=5 // pred_check_branch
        %94 = sbr.rel (%p91) target = $region12
      $region11: #{tpu_custom_call.1} parent=5 // pred_region
        %s95 = ssub.s32 %s13, 1
        // Predicated region
        $region13: #{tpu_custom_call.1} parent=11 // pred_check
          %p96 = pneg %p34
        $region14: #{tpu_custom_call.1} parent=11 // pred_check_branch
          %98 = sbr.rel (%p96) target = $region16
        $region15: #{tpu_custom_call.1} parent=11 // pred_region
          %s100 = ssub.s32 32, 32
          %101 = vsyncadd [#allocation3], %s100
          %s103 = sshll.u32 [#allocation2], 4
          %s104 = int_to_ptr.vmem [resolvable:$true] %s103
          %106 = dma.hbm_to_vmem [thread:$0]  %s0, 32, %s104, [#allocation3]
        $region16: #{tpu_custom_call.1} parent=11 // pred_fallthru
          _
      $region12: #{tpu_custom_call.1} parent=5 // pred_fallthru
        _
      %p107 = scmp.lt.s32.totalorder %s13, 2
      // Predicated region
      $region17: #{tpu_custom_call.1} parent=5 // pred_check
        %p108 = pneg %p107
      $region18: #{tpu_custom_call.1} parent=5 // pred_check_branch
        %110 = sbr.rel (%p108) target = $region20
      $region19: #{tpu_custom_call.1} parent=5 // pred_region
        // Predicated region
        $region21: #{tpu_custom_call.1} parent=19 // pred_check
          %p111 = pneg %p54
        $region22: #{tpu_custom_call.1} parent=19 // pred_check_branch
          %113 = sbr.rel (%p111) target = $region24
        $region23: #{tpu_custom_call.1} parent=19 // pred_region
          %s114 = sand.u32 %s44, 1
          %s115 = scalar_lea.sflag [#allocation6], %s114
          %s116 = sand.u32 %s44, 1
          %s117 = smul.addr %s116, 8
          %s118 = scalar_lea.vmem [#allocation5], %s117
          %s120 = ssub.s32 128, 128
          %121 = vsyncadd %s115, %s120
          %s122 = smul.addr %s13, 2
          %s123 = smul.addr %s122, 64
          %s124 = scalar_lea.hbm %s1, %s123
          %s126 = sshll.u32 %s118, 4
          %s127 = int_to_ptr.vmem [resolvable:$true] %s126
          %129 = dma.hbm_to_vmem [thread:$0]  %s124, 128, %s127, %s115
        $region24: #{tpu_custom_call.1} parent=19 // pred_fallthru
          _
      $region20: #{tpu_custom_call.1} parent=5 // pred_fallthru
        _
      %p130 = scmp.le.s32.totalorder 1, %s13
      %p131 = scmp.lt.s32.totalorder %s13, 3
      %p132 = pnand %p130, %p131
      %p133 = pneg %p132
      // Predicated region
      $region25: #{tpu_custom_call.1} parent=5 // pred_check
        _
      $region26: #{tpu_custom_call.1} parent=5 // pred_check_branch
        %135 = sbr.rel (%p132) target = $region28
      $region27: #{tpu_custom_call.1} parent=5 // pred_region
        %s136 = ssub.s32 %s13, 1
        // Predicated region
        $region29: #{tpu_custom_call.1} parent=27 // pred_check
          %p137 = pneg %p34
        $region30: #{tpu_custom_call.1} parent=27 // pred_check_branch
          %139 = sbr.rel (%p137) target = $region32
        $region31: #{tpu_custom_call.1} parent=27 // pred_region
          %140 = dma.done [#allocation3], 32
        $region32: #{tpu_custom_call.1} parent=27 // pred_fallthru
          _
        %s141 = sand.u32 %s47, 1
        %s142 = scalar_lea.sflag [#allocation6], %s141
        %s143 = sand.u32 %s47, 1
        %s144 = smul.addr %s143, 8
        %s145 = scalar_lea.vmem [#allocation5], %s144
        // Predicated region
        $region33: #{tpu_custom_call.1} parent=27 // pred_check
          %p146 = pneg %p60
        $region34: #{tpu_custom_call.1} parent=27 // pred_check_branch
          %148 = sbr.rel (%p146) target = $region36
        $region35: #{tpu_custom_call.1} parent=27 // pred_region
          %149 = dma.done %s142, 128
        $region36: #{tpu_custom_call.1} parent=27 // pred_fallthru
          _
        %p150 = pneg %p34
        %p151 = pneg %p31
        %s152 = sand.u32 %s47, 1
        %s153 = scalar_lea.sflag [#allocation6], %s152
        %s154 = sand.u32 %s47, 1
        %s155 = smul.addr %s154, 8
        %s156 = scalar_lea.vmem [#allocation5], %s155
        %p157 = pneg %p60
        %p158 = pneg %p57
        %p159 = pneg %p81
        %p160 = pneg %p78
        %v161 = vld [vmem:[%s145] sm:$0xff]
        %v162 = vld [vmem:[#allocation2] sm:$0x3]
        %p163 = scmp.eq.s32.totalorder %s18, 0
        // Predicated region
        $region37: #{tpu_custom_call.1} parent=27 // pred_check
          %p164 = pneg %p163
        $region38: #{tpu_custom_call.1} parent=27 // pred_check_branch
          %166 = sbr.rel (%p164) target = $region40
        $region39: #{tpu_custom_call.1} parent=27 // pred_region
          %s167 = scalar_lea.smem [#allocation7], 0
          %168 = sst [smem:[%s167]] 0.0
          %s169 = scalar_lea.smem [#allocation7], 1
          %170 = sst [smem:[%s169]] 0.0
        $region40: #{tpu_custom_call.1} parent=27 // pred_fallthru
          _
        %v172 = vcombine.high %v161, %v161
        %vm174 = vcmask 1043456
        %v175 = vsel %vm174, %v161, -inf
        %v176 = vrot.slane %v175, 4
        %v177 = vmax.f32 %v175, %v176
        %v178 = vrot.slane %v177, 2
        %v179 = vmax.f32 %v177, %v178
        %v180 = vrot.slane %v179, 1
        %v181 = vmax.f32 %v179, %v180
        %v182 = vsel %vm174, %v172, -inf
        %v183 = vrot.slane %v182, 4
        %v184 = vmax.f32 %v182, %v183
        %v185 = vrot.slane %v184, 2
        %v186 = vmax.f32 %v184, %v185
        %v187 = vrot.slane %v186, 1
        %v188 = vmax.f32 %v186, %v187
        %v191 = vcombine.low %v181, %v188
        %v193 = vsub.f32 %v161, %v191
        %v194 = vmul.f32 %v193, 1.442695
        %v195 = vpow.pop %v194
        %v197 = vcombine.high %v195, %v195
        %v199 = vsel %vm174, %v195, 0.0
        %v200 = vrot.slane %v199, 4
        %v201 = vadd.f32 %v199, %v200
        %v202 = vrot.slane %v201, 2
        %v203 = vadd.f32 %v201, %v202
        %v204 = vrot.slane %v203, 1
        %v205 = vadd.f32 %v203, %v204
        %v206 = vsel %vm174, %v197, 0.0
        %v207 = vrot.slane %v206, 4
        %v208 = vadd.f32 %v206, %v207
        %v209 = vrot.slane %v208, 2
        %v210 = vadd.f32 %v208, %v209
        %v211 = vrot.slane %v210, 1
        %v212 = vadd.f32 %v210, %v211
        %v213 = vlog2.pop %v205
        %v214 = vmul.f32 %v213, 0.6931472
        %v215 = vlog2.pop %v212
        %v216 = vmul.f32 %v215, 0.6931472
        %vm217 = vcmask 1040384
        %v218 = vsel %vm217, %v214, 0.0
        %v219 = vsel %vm217, %v216, 0.0
        %v220 = vadd.f32 %v218, %v219
        %221 = vadd.xlane.f32.xlu0 %v220
        %v222 = vpop.xlane.xlu0 %221
        %v223 = vrot.slane %v222, 4
        %v224 = vadd.f32 %v222, %v223
        %v225 = vrot.slane %v224, 2
        %v226 = vadd.f32 %v224, %v225
        %v227 = vrot.slane %v226, 1
        %v228 = vadd.f32 %v226, %v227
        %s229 = vtos %v228
        %230 = vrot.lane.b32.xlu0 %v161, 16
        %v231 = vpop.permute.xlu0 %230
        %232 = vrot.lane.b32.xlu0 %v172, 16
        %v233 = vpop.permute.xlu0 %232
        %v234 = vlaneseq
        %v235 = vand.u32 %v234, 127
        %vm236 = vcmp.lt.s32.totalorder %v235, 16
        %v237 = vsel %vm236, %v231, %v233
        %v238 = vsel %vm236, %v233, %v231
        %v239 = vlaneseq
        %v240 = vshrl.u32 %v239, 7
        %v241 = vsub.s32 0, %v240
        %v242 = vrot.slane %v162, %v241
        %v243 = vlaneseq
        %v244 = vshrl.u32 %v243, 7
        %v245 = vsub.s32 1, %v244
        %v246 = vrot.slane %v162, %v245
        %247 = vrot.lane.b32.xlu0 %v242, 16
        %v248 = vpop.permute.xlu0 %247
        %249 = vrot.lane.b32.xlu0 %v246, 16
        %v250 = vpop.permute.xlu0 %249
        %v251 = vsel %vm236, %v248, %v250
        %v252 = vsel %vm236, %v250, %v248
        %v253 = vsub.s32 %v252, %v242
        %v254 = vsub.s32 %v251, %v246
        %vm255 = vcmp.lt.s32.totalorder %v253, 0
        %v256 = vsub.s32 0, %v253
        %v257 = vsel %vm255, %v256, %v253
        %vm258 = vcmp.lt.s32.totalorder %v254, 0
        %v259 = vsub.s32 0, %v254
        %v260 = vsel %vm258, %v259, %v254
        %vm261 = vcmp.eq.s32.totalorder %v257, 65536
        %vm262 = vcmp.eq.s32.totalorder %v260, 65536
        %v263 = vsub.f32 %v238, %v161
        %v264 = vsub.f32 %v237, %v172
        %v265 = vand.u32 2147483647, %v263
        %v266 = vand.u32 2147483647, %v264
        %v267 = vsel %vm261, 1, 0
        %v268 = vsel %vm262, 1, 0
        %v269 = vlaneseq
        %v270 = vshrl.u32 %v269, 7
        %v271 = vsub.s32 0, %v270
        %v272 = vrot.slane %v267, %v271
        %v273 = vlaneseq
        %v274 = vshrl.u32 %v273, 7
        %v275 = vsub.s32 0, %v274
        %v276 = vrot.slane %v268, %v275
        %vm277 = vcmp.eq.s32.totalorder %v272, 1
        %vm278 = vcmp.eq.s32.totalorder %v276, 1
        %v279 = vsel %vm277, %v265, 0.0
        %v280 = vsel %vm278, %v266, 0.0
        %v281 = vsel %vm174, %v279, 0.0
        %v282 = vsel %vm174, %v280, 0.0
        %v283 = vadd.f32 %v281, %v282
        %284 = vadd.xlane.f32.xlu0 %v283
        %v285 = vpop.xlane.xlu0 %284
        %v286 = vrot.slane %v285, 4
        %v287 = vadd.f32 %v285, %v286
        %v288 = vrot.slane %v287, 2
        %v289 = vadd.f32 %v287, %v288
        %v290 = vrot.slane %v289, 1
        %v291 = vadd.f32 %v289, %v290
        %s292 = vtos %v291
        %293 = vrot.lane.b32.xlu0 %v161, 1
        %v294 = vpop.permute.xlu0 %293
        %295 = vrot.lane.b32.xlu0 %v172, 1
        %v296 = vpop.permute.xlu0 %295
        %vm297 = vcmp.lt.s32.totalorder %v235, 1
        %v298 = vsel %vm297, %v294, %v296
        %v299 = vsel %vm297, %v296, %v294
        %300 = vrot.lane.b32.xlu0 %v242, 1
        %v301 = vpop.permute.xlu0 %300
        %302 = vrot.lane.b32.xlu0 %v246, 1
        %v303 = vpop.permute.xlu0 %302
        %v304 = vsel %vm297, %v301, %v303
        %v305 = vsel %vm297, %v303, %v301
        %v306 = vsub.s32 %v305, %v242
        %v307 = vsub.s32 %v304, %v246
        %vm308 = vcmp.lt.s32.totalorder %v306, 0
        %v309 = vsub.s32 0, %v306
        %v310 = vsel %vm308, %v309, %v306
        %vm311 = vcmp.lt.s32.totalorder %v307, 0
        %v312 = vsub.s32 0, %v307
        %v313 = vsel %vm311, %v312, %v307
        %vm314 = vcmp.eq.s32.totalorder %v310, 1
        %vm315 = vcmp.eq.s32.totalorder %v313, 1
        %v316 = vsub.f32 %v299, %v161
        %v317 = vsub.f32 %v298, %v172
        %v318 = vand.u32 2147483647, %v316
        %v319 = vand.u32 2147483647, %v317
        %v320 = vsel %vm314, 1, 0
        %v321 = vsel %vm315, 1, 0
        %v322 = vlaneseq
        %v323 = vshrl.u32 %v322, 7
        %v324 = vsub.s32 0, %v323
        %v325 = vrot.slane %v320, %v324
        %v326 = vlaneseq
        %v327 = vshrl.u32 %v326, 7
        %v328 = vsub.s32 0, %v327
        %v329 = vrot.slane %v321, %v328
        %vm330 = vcmp.eq.s32.totalorder %v325, 1
        %vm331 = vcmp.eq.s32.totalorder %v329, 1
        %v332 = vsel %vm330, %v318, 0.0
        %v333 = vsel %vm331, %v319, 0.0
        %v334 = vsel %vm174, %v332, 0.0
        %v335 = vsel %vm174, %v333, 0.0
        %v336 = vadd.f32 %v334, %v335
        %337 = vadd.xlane.f32.xlu0 %v336
        %v338 = vpop.xlane.xlu0 %337
        %v339 = vrot.slane %v338, 4
        %v340 = vadd.f32 %v338, %v339
        %v341 = vrot.slane %v340, 2
        %v342 = vadd.f32 %v340, %v341
        %v343 = vrot.slane %v342, 1
        %v344 = vadd.f32 %v342, %v343
        %s345 = vtos %v344
        %s346 = sld [smem:[#allocation7]]
        %s347 = smul.f32 %s229, 0.001953125
        %s348 = sadd.f32 %s346, %s347
        %s349 = scalar_lea.smem [#allocation7], 0
        %350 = sst [smem:[%s349]] %s348
        %s351 = sld [smem:[#allocation7 + $0x1]]
        %s352 = smul.f32 %s292, 0.00052083336
        %s353 = sadd.f32 %s351, %s352
        %s354 = smul.f32 %s345, 0.00052083336
        %s355 = sadd.f32 %s353, %s354
        %s356 = scalar_lea.smem [#allocation7], 1
        %357 = sst [smem:[%s356]] %s355
        // Predicated region
        $region41: #{tpu_custom_call.1} parent=27 // pred_check
          %p358 = pneg %p78
        $region42: #{tpu_custom_call.1} parent=27 // pred_check_branch
          %360 = sbr.rel (%p358) target = $region44
        $region43: #{tpu_custom_call.1} parent=27 // pred_region
          %s362 = ssub.s32 16, 16
          %363 = vsyncadd [#allocation4], %s362
          %366 = dma.smem_to_hbm [#allocation7], 16, %s2, [#allocation4]
        $region44: #{tpu_custom_call.1} parent=27 // pred_fallthru
          _
        // Predicated region
        $region45: #{tpu_custom_call.1} parent=27 // pred_check
          %p367 = pneg %p78
        $region46: #{tpu_custom_call.1} parent=27 // pred_check_branch
          %369 = sbr.rel (%p367) target = $region48
        $region47: #{tpu_custom_call.1} parent=27 // pred_region
          %370 = dma.done [#allocation4], 16
        $region48: #{tpu_custom_call.1} parent=27 // pred_fallthru
          _
        %371 = sfence
      $region28: #{tpu_custom_call.1} parent=5 // pred_fallthru
        _
      %p372 = scmp.le.s32.totalorder 2, %s13
      // Predicated region
      $region49: #{tpu_custom_call.1} parent=5 // pred_check
        %p373 = pneg %p372
      $region50: #{tpu_custom_call.1} parent=5 // pred_check_branch
        %375 = sbr.rel (%p373) target = $region52
      $region51: #{tpu_custom_call.1} parent=5 // pred_region
        %s376 = ssub.s32 %s13, 2
      $region52: #{tpu_custom_call.1} parent=5 // pred_fallthru
        _
    $region6: #{tpu_custom_call.1} parent=1 // loop_footer
      %s17 = sadd.s32 1, %s13
    $region7: #{tpu_custom_call.1} parent=1 // loop_footer_branch
      %12 = sbr.rel target = $region3
    $region8: #{tpu_custom_call.1} parent=1 // loop_exit
      _
    %377 = vsyncpa [#allocation3], 1
    %s378 = scalar_lea.sflag [#allocation3], 1
    %379 = vsyncpa %s378, 1
    %380 = vsyncpa [#allocation6], 1
    %s381 = scalar_lea.sflag [#allocation6], 1
    %382 = vsyncpa %s381, 1
    %383 = vsyncpa [#allocation4], 1
    %s384 = scalar_lea.sflag [#allocation4], 1
    %385 = vsyncpa %s384, 1

</llo_original>
